<compile_context>
chip_gen: v7x
topology: tpu7x:2x2x1
jax: 0.10.0
libtpu: 0.0.40
codegen_flags: <defaults>
</compile_context>

<pallas_src>
import functools

import jax
import jax.numpy as jnp
import numpy as np
from jax import lax
from jax.experimental import pallas as pl
from jax.experimental.pallas import tpu as pltpu

SMOOTH = 0.0
EPS = 1e-7
LANE = 128
CHUNK = 512           # lane-chunk width per inner-loop step == accumulator width
MAX_TILE = 65536      # cap on pixels per grid step


def _jaccard_partial_kernel(logits_ref, target_ref,
                            inter_ref, union_ref, pres_ref,
                            *, hw, tile, chunk, n_chunks, tiles_per_p):
    """Accumulate per-class intersection / union / presence partial sums.

    logits_ref: (C, tile)  classes on sublanes, pixels on lanes.
    target_ref: (1, tile)  int32 class ids (garbage past HW; masked here).
    outputs:    (C, chunk) lane-parallel partials, resident across the last
                ("arbitrary") grid axis and updated once per grid step.
    """
    p = pl.program_id(1)
    t = pl.program_id(2)
    tile_idx = p * tiles_per_p + t
    remaining = hw - tile_idx * tile            # valid pixels in this tile (>= 1)

    c = logits_ref.shape[0]
    lane = lax.broadcasted_iota(jnp.int32, (1, chunk), 1)   # hoisted out of loop
    cls = lax.broadcasted_iota(jnp.int32, (c, chunk), 0)

    def chunk_body(j, carry):
        inter, union, pres = carry
        start = j * chunk
        if not isinstance(start, int):
            start = pl.multiple_of(start, chunk)            # aligned lane slice
        x = logits_ref[:, pl.ds(start, chunk)].astype(jnp.float32)   # (C, chunk)
        tgt = target_ref[:, pl.ds(start, chunk)]                      # (1, chunk)

        # softmax over the class (sublane) axis == log_softmax(dim=1).exp()
        m = jnp.max(x, axis=0, keepdims=True)
        e = jnp.exp(x - m)                                            # EUP
        denom = jnp.sum(e, axis=0, keepdims=True)
        probs = e * pl.reciprocal(denom)                              # exact recip

        # Tail mask: pixels past HW hold un-DMA'd garbage -> zero contribution.
        valid = (start + lane) < remaining                            # (1, chunk)
        probs = jnp.where(valid, probs, 0.0)
        eq = (cls == tgt) & valid                                     # one-hot on the fly

        # Fused accumulators (pure VPU adds, vreg-resident carries):
        #   inter = sum(probs * onehot)
        #   union = sum(probs + onehot - probs*onehot) == sum(where(eq, 1, probs))
        inter = inter + jnp.where(eq, probs, 0.0)
        union = union + jnp.where(eq, 1.0, probs)
        pres = jnp.maximum(pres, eq.astype(jnp.float32))              # class presence (OR)
        return inter, union, pres

    zeros = jnp.zeros((c, chunk), jnp.float32)
    if n_chunks == 1:
        inter, union, pres = chunk_body(0, (zeros, zeros, zeros))
    else:
        inter, union, pres = lax.fori_loop(
            0, n_chunks, chunk_body, (zeros, zeros, zeros),
            unroll=(True if n_chunks <= 8 else 4))

    # Single accumulator update per grid step (outputs stay resident across t).
    @pl.when(t == 0)
    def _():
        inter_ref[...] = inter
        union_ref[...] = union
        pres_ref[...] = pres

    @pl.when(t != 0)
    def _():
        inter_ref[...] += inter
        union_ref[...] += union
        pres_ref[...] = jnp.maximum(pres_ref[...], pres)


@functools.partial(jax.jit, static_argnames=("tile_hw",))
def jaccard_loss_multiclass(logits_nchw, target_nhw, *, tile_hw=None):
    """logits_nchw: (N, C, H, W) float; target_nhw: (N, H, W) int.

    Returns the scalar Jaccard loss (multiclass, from_logits=True,
    log_loss=False, classes=None, smooth=0, eps=1e-7).
    """
    N, C, H, W = logits_nchw.shape
    HW = H * W

    # Free reshapes of NCHW / NHW -- no transpose, no padding copy, dtype kept.
    logits = logits_nchw.reshape(N, C, HW)
    target = target_nhw.reshape(N, 1, HW).astype(jnp.int32)
    # TODO(synk): pass targets as int8 when C <= 127 to shave target DMA traffic.

    # Per-generation VMEM-aware tile sizing (v7x: 64 MiB physical; v5e/v6e: 128 MiB).
    try:
        vmem_cap = int(pltpu.get_tpu_info().vmem_capacity_bytes)
    except Exception:
        vmem_cap = 64 * 1024 * 1024
    vmem_limit = int(min(max(vmem_cap // 2, 16 * 1024 * 1024), 64 * 1024 * 1024))

    bytes_per_px = C * logits.dtype.itemsize + 4          # logits + int32 target
    if HW <= CHUNK:
        chunk = HW                                        # single tile == full dim
        tile = HW
    else:
        chunk = CHUNK
        budget = (vmem_limit * 3) // 5                    # double-buffered input blocks
        max_tile = budget // (2 * bytes_per_px)
        if tile_hw is not None:
            max_tile = int(tile_hw)
        tile = (max_tile // chunk) * chunk
        tile = max(chunk, min(tile, MAX_TILE, (HW // chunk) * chunk))
    n_chunks = tile // chunk
    num_tiles = -(-HW // tile)

    # Second "parallel" pixel axis so small/odd N still fills both v7x cores.
    P = 2 if num_tiles % 2 == 0 else 1
    tiles_per_p = num_tiles // P

    kernel = functools.partial(
        _jaccard_partial_kernel, hw=HW, tile=tile, chunk=chunk,
        n_chunks=n_chunks, tiles_per_p=tiles_per_p)

    part_shape = jax.ShapeDtypeStruct((N, P, C, chunk), jnp.float32)
    part_spec = pl.BlockSpec((pl.Squeezed(), pl.Squeezed(), C, chunk),
                             lambda n, p, t: (n, p, 0, 0))
    in_idx = lambda n, p, t: (n, 0, p * tiles_per_p + t)

    inter_p, union_p, pres_p = pl.pallas_call(
        kernel,
        out_shape=(part_shape, part_shape, part_shape),
        grid_spec=pltpu.PrefetchScalarGridSpec(
            num_scalar_prefetch=0,
            grid=(N, P, tiles_per_p),
            in_specs=[
                # classes on sublanes, pixels on lanes
                pl.BlockSpec((pl.Squeezed(), C, tile), in_idx),
                pl.BlockSpec((pl.Squeezed(), 1, tile), in_idx),
            ],
            out_specs=(part_spec, part_spec, part_spec),
        ),
        compiler_params=pltpu.CompilerParams(
            dimension_semantics=("parallel", "parallel", "arbitrary"),
            vmem_limit_bytes=vmem_limit,
        ),
    )(logits, target)

    # Finalize on tiny (N, P, C, chunk) partials: reduce over batch/split/lanes.
    inter = jnp.sum(inter_p, axis=(0, 1, 3))               # (C,)
    union = jnp.sum(union_p, axis=(0, 1, 3))               # = cardinality - intersection
    pres = jnp.max(pres_p, axis=(0, 1, 3))
    score = (inter + SMOOTH) / (jnp.maximum(union, EPS) + SMOOTH)
    loss = (1.0 - score) * (pres > 0).astype(jnp.float32)  # log_loss=False, masked
    # TODO(synk): `classes` sub-selection (classes=None here) would be loss[classes] before mean.
    return jnp.mean(loss)


def _reference_jax(logits_nchw, target_nhw):
    """Pure-JAX reference mirroring the PyTorch forward (multiclass)."""
    N, C, H, W = logits_nchw.shape
    probs = jax.nn.softmax(logits_nchw.astype(jnp.float32), axis=1)
    probs = probs.reshape(N, C, H * W)
    onehot = jax.nn.one_hot(target_nhw.reshape(N, H * W), C, dtype=jnp.float32)
    onehot = jnp.transpose(onehot, (0, 2, 1))               # (N, C, HW)
    dims = (0, 2)
    inter = jnp.sum(probs * onehot, axis=dims)
    card = jnp.sum(probs + onehot, axis=dims)
    union = card - inter
    score = (inter + SMOOTH) / (jnp.maximum(union, EPS) + SMOOTH)
    loss = 1.0 - score
    mask = (jnp.sum(onehot, axis=dims) > 0).astype(jnp.float32)
    return jnp.mean(loss * mask)


if __name__ == "__main__":
    key = jax.random.PRNGKey(0)
    k = jax.random.split(key, 6)

    # Case 1: (2, 4, 16, 16) -- single tile / single chunk, batch-parallel axis.
    N, C, H, W = 2, 4, 16, 16
    logits = jax.random.normal(k[0], (N, C, H, W), dtype=jnp.float32)
    target = jax.random.randint(k[1], (N, H, W), 0, C, dtype=jnp.int32)
    loss = jax.block_until_ready(jaccard_loss_multiclass(logits, target))
    ref = jax.block_until_ready(_reference_jax(logits, target))
    np.testing.assert_allclose(np.asarray(loss), np.asarray(ref), rtol=1e-4, atol=1e-5)

    # Case 2: ragged HW = 100 (lane dim not a multiple of 128; full-dim block).
    N2, C2, H2, W2 = 2, 5, 10, 10
    logits2 = jax.random.normal(k[2], (N2, C2, H2, W2), dtype=jnp.float32)
    target2 = jax.random.randint(k[3], (N2, H2, W2), 0, C2, dtype=jnp.int32)
    loss2 = jax.block_until_ready(jaccard_loss_multiclass(logits2, target2))
    ref2 = jax.block_until_ready(_reference_jax(logits2, target2))
    np.testing.assert_allclose(np.asarray(loss2), np.asarray(ref2), rtol=1e-4, atol=1e-5)

    # Case 3: HW = 3584 with tile_hw=1024 -> grid (1, 2, 2): exercises the
    # pixel-parallel axis, multi-chunk fori_loop, cross-tile accumulation and
    # the masked ragged tail (last tile has 512 valid + 512 garbage pixels).
    N3, C3, H3, W3 = 1, 3, 32, 112
    logits3 = jax.random.normal(k[4], (N3, C3, H3, W3), dtype=jnp.float32)
    target3 = jax.random.randint(k[5], (N3, H3, W3), 0, C3, dtype=jnp.int32)
    loss3 = jax.block_until_ready(
        jaccard_loss_multiclass(logits3, target3, tile_hw=1024))
    ref3 = jax.block_until_ready(_reference_jax(logits3, target3))
    np.testing.assert_allclose(np.asarray(loss3), np.asarray(ref3), rtol=1e-4, atol=1e-5)

    print("KERNEL_OK")
</pallas_src>

<mosaic_0001>
module attributes {stable_mosaic.version = 11 : i64} {
  func.func @_jaccard_partial_kernel(%arg0: i32, %arg1: i32, %arg2: i32, %arg3: memref<1x4x256xf32, #tpu.memory_space<vmem>>, %arg4: memref<1x1x256xi32, #tpu.memory_space<vmem>>, %arg5: memref<1x1x4x256xf32, #tpu.memory_space<vmem>>, %arg6: memref<1x1x4x256xf32, #tpu.memory_space<vmem>>, %arg7: memref<1x1x4x256xf32, #tpu.memory_space<vmem>>) attributes {dimension_semantics = [#tpu.dimension_semantics<parallel>, #tpu.dimension_semantics<parallel>, #tpu.dimension_semantics<arbitrary>], iteration_bounds = array<i64: 2, 1, 1>, scalar_prefetch = 0 : i64, scratch_operands = 0 : i64, tpu.core_type = #tpu.core_type<tc>, window_params = [{transform_indices = @transform_0, window_bounds = array<i64: 1, 4, 256>}, {transform_indices = @transform_1, window_bounds = array<i64: 1, 1, 256>}, {transform_indices = @transform_2, window_bounds = array<i64: 1, 1, 4, 256>}, {transform_indices = @transform_3, window_bounds = array<i64: 1, 1, 4, 256>}, {transform_indices = @transform_4, window_bounds = array<i64: 1, 1, 4, 256>}]} {
    %c1_i32 = arith.constant 1 : i32
    %0 = arith.muli %arg1, %c1_i32 : i32
    %1 = arith.addi %0, %arg2 : i32
    %c256_i32 = arith.constant 256 : i32
    %2 = arith.muli %1, %c256_i32 : i32
    %c256_i32_0 = arith.constant 256 : i32
    %3 = arith.subi %c256_i32_0, %2 : i32
    %4 = tpu.iota {dimensions = array<i32: 1>} : vector<1x256xi32>
    %5 = tpu.iota {dimensions = array<i32: 0>} : vector<4x256xi32>
    %cst = arith.constant 0.000000e+00 : f32
    %6 = vector.broadcast %cst : f32 to vector<4x256xf32>
    %c0 = arith.constant 0 : index
    %c0_1 = arith.constant 0 : index
    %c0_2 = arith.constant 0 : index
    %7 = vector.load %arg3[%c0, %c0_1, %c0_2] : memref<1x4x256xf32, #tpu.memory_space<vmem>>, vector<1x4x256xf32>
    %8 = vector.shape_cast %7 : vector<1x4x256xf32> to vector<4x256xf32>
    %c0_3 = arith.constant 0 : index
    %c0_4 = arith.constant 0 : index
    %c0_5 = arith.constant 0 : index
    %9 = vector.load %arg4[%c0_3, %c0_4, %c0_5] : memref<1x1x256xi32, #tpu.memory_space<vmem>>, vector<1x1x256xi32>
    %10 = vector.shape_cast %9 : vector<1x1x256xi32> to vector<1x256xi32>
    %cst_6 = arith.constant dense<0xFF800000> : vector<256xf32>
    %11 = vector.multi_reduction <maximumf>, %8, %cst_6 [0] : vector<4x256xf32> to vector<256xf32>
    %12 = vector.shape_cast %11 : vector<256xf32> to vector<1x256xf32>
    %13 = vector.broadcast %12 : vector<1x256xf32> to vector<4x256xf32>
    %14 = arith.subf %8, %13 : vector<4x256xf32>
    %15 = math.exp %14 : vector<4x256xf32>
    %cst_7 = arith.constant dense<0.000000e+00> : vector<256xf32>
    %16 = vector.multi_reduction <add>, %15, %cst_7 [0] : vector<4x256xf32> to vector<256xf32>
    %17 = vector.shape_cast %16 : vector<256xf32> to vector<1x256xf32>
    %18 = tpu.reciprocal %17 : vector<1x256xf32> -> vector<1x256xf32>
    %19 = vector.broadcast %18 : vector<1x256xf32> to vector<4x256xf32>
    %20 = arith.mulf %15, %19 : vector<4x256xf32>
    %c0_i32 = arith.constant 0 : i32
    %21 = vector.broadcast %c0_i32 : i32 to vector<1x256xi32>
    %22 = arith.addi %21, %4 : vector<1x256xi32>
    %23 = vector.broadcast %3 : i32 to vector<1x256xi32>
    %24 = arith.cmpi slt, %22, %23 : vector<1x256xi32>
    %cst_8 = arith.constant 0.000000e+00 : f32
    %25 = vector.shape_cast %24 : vector<1x256xi1> to vector<1x256xi1>
    %26 = vector.broadcast %25 : vector<1x256xi1> to vector<4x256xi1>
    %27 = vector.broadcast %cst_8 : f32 to vector<4x256xf32>
    %28 = arith.select %26, %20, %27 : vector<4x256xi1>, vector<4x256xf32>
    %29 = vector.broadcast %10 : vector<1x256xi32> to vector<4x256xi32>
    %30 = arith.cmpi eq, %5, %29 : vector<4x256xi32>
    %31 = vector.broadcast %24 : vector<1x256xi1> to vector<4x256xi1>
    %32 = arith.andi %30, %31 : vector<4x256xi1>
    %cst_9 = arith.constant 0.000000e+00 : f32
    %33 = vector.broadcast %cst_9 : f32 to vector<4x256xf32>
    %34 = arith.select %32, %28, %33 : vector<4x256xi1>, vector<4x256xf32>
    %35 = arith.addf %6, %34 : vector<4x256xf32>
    %cst_10 = arith.constant 1.000000e+00 : f32
    %36 = vector.broadcast %cst_10 : f32 to vector<4x256xf32>
    %37 = arith.select %32, %36, %28 : vector<4x256xi1>, vector<4x256xf32>
    %38 = arith.addf %6, %37 : vector<4x256xf32>
    %39 = arith.extui %32 : vector<4x256xi1> to vector<4x256xi32>
    %40 = arith.sitofp %39 : vector<4x256xi32> to vector<4x256xf32>
    %41 = arith.maximumf %6, %40 : vector<4x256xf32>
    %c0_i32_11 = arith.constant 0 : i32
    %42 = arith.cmpi eq, %arg2, %c0_i32_11 : i32
    %43 = arith.extui %42 : i1 to i32
    %c0_i32_12 = arith.constant 0 : i32
    %44 = arith.cmpi ne, %43, %c0_i32_12 : i32
    scf.if %44 {
      %c0_15 = arith.constant 0 : index
      %c0_16 = arith.constant 0 : index
      %c0_17 = arith.constant 0 : index
      %c0_18 = arith.constant 0 : index
      %48 = vector.load %arg5[%c0_15, %c0_16, %c0_17, %c0_18] : memref<1x1x4x256xf32, #tpu.memory_space<vmem>>, vector<1x1x4x256xf32>
      %49 = vector.shape_cast %48 : vector<1x1x4x256xf32> to vector<4x256xf32>
      %50 = vector.shape_cast %35 : vector<4x256xf32> to vector<1x1x4x256xf32>
      tpu.vector_store %arg5[%c0_15, %c0_16, %c0_17, %c0_18], %50 {strides = array<i32>} : memref<1x1x4x256xf32, #tpu.memory_space<vmem>>, vector<1x1x4x256xf32>,
      %c0_19 = arith.constant 0 : index
      %c0_20 = arith.constant 0 : index
      %c0_21 = arith.constant 0 : index
      %c0_22 = arith.constant 0 : index
      %51 = vector.load %arg6[%c0_19, %c0_20, %c0_21, %c0_22] : memref<1x1x4x256xf32, #tpu.memory_space<vmem>>, vector<1x1x4x256xf32>
      %52 = vector.shape_cast %51 : vector<1x1x4x256xf32> to vector<4x256xf32>
      %53 = vector.shape_cast %38 : vector<4x256xf32> to vector<1x1x4x256xf32>
      tpu.vector_store %arg6[%c0_19, %c0_20, %c0_21, %c0_22], %53 {strides = array<i32>} : memref<1x1x4x256xf32, #tpu.memory_space<vmem>>, vector<1x1x4x256xf32>,
      %c0_23 = arith.constant 0 : index
      %c0_24 = arith.constant 0 : index
      %c0_25 = arith.constant 0 : index
      %c0_26 = arith.constant 0 : index
      %54 = vector.load %arg7[%c0_23, %c0_24, %c0_25, %c0_26] : memref<1x1x4x256xf32, #tpu.memory_space<vmem>>, vector<1x1x4x256xf32>
      %55 = vector.shape_cast %54 : vector<1x1x4x256xf32> to vector<4x256xf32>
      %56 = vector.shape_cast %41 : vector<4x256xf32> to vector<1x1x4x256xf32>
      tpu.vector_store %arg7[%c0_23, %c0_24, %c0_25, %c0_26], %56 {strides = array<i32>} : memref<1x1x4x256xf32, #tpu.memory_space<vmem>>, vector<1x1x4x256xf32>,
    } else {
    }
    %c0_i32_13 = arith.constant 0 : i32
    %45 = arith.cmpi ne, %arg2, %c0_i32_13 : i32
    %46 = arith.extui %45 : i1 to i32
    %c0_i32_14 = arith.constant 0 : i32
    %47 = arith.cmpi ne, %46, %c0_i32_14 : i32
    scf.if %47 {
      %c0_15 = arith.constant 0 : index
      %c0_16 = arith.constant 0 : index
      %c0_17 = arith.constant 0 : index
      %c0_18 = arith.constant 0 : index
      %48 = vector.load %arg5[%c0_15, %c0_16, %c0_17, %c0_18] : memref<1x1x4x256xf32, #tpu.memory_space<vmem>>, vector<1x1x4x256xf32>
      %49 = vector.shape_cast %48 : vector<1x1x4x256xf32> to vector<4x256xf32>
      %50 = arith.addf %49, %35 : vector<4x256xf32>
      %c0_19 = arith.constant 0 : index
      %c0_20 = arith.constant 0 : index
      %c0_21 = arith.constant 0 : index
      %c0_22 = arith.constant 0 : index
      %51 = vector.load %arg5[%c0_19, %c0_20, %c0_21, %c0_22] : memref<1x1x4x256xf32, #tpu.memory_space<vmem>>, vector<1x1x4x256xf32>
      %52 = vector.shape_cast %51 : vector<1x1x4x256xf32> to vector<4x256xf32>
      %53 = vector.shape_cast %50 : vector<4x256xf32> to vector<1x1x4x256xf32>
      tpu.vector_store %arg5[%c0_19, %c0_20, %c0_21, %c0_22], %53 {strides = array<i32>} : memref<1x1x4x256xf32, #tpu.memory_space<vmem>>, vector<1x1x4x256xf32>,
      %c0_23 = arith.constant 0 : index
      %c0_24 = arith.constant 0 : index
      %c0_25 = arith.constant 0 : index
      %c0_26 = arith.constant 0 : index
      %54 = vector.load %arg6[%c0_23, %c0_24, %c0_25, %c0_26] : memref<1x1x4x256xf32, #tpu.memory_space<vmem>>, vector<1x1x4x256xf32>
      %55 = vector.shape_cast %54 : vector<1x1x4x256xf32> to vector<4x256xf32>
      %56 = arith.addf %55, %38 : vector<4x256xf32>
      %c0_27 = arith.constant 0 : index
      %c0_28 = arith.constant 0 : index
      %c0_29 = arith.constant 0 : index
      %c0_30 = arith.constant 0 : index
      %57 = vector.load %arg6[%c0_27, %c0_28, %c0_29, %c0_30] : memref<1x1x4x256xf32, #tpu.memory_space<vmem>>, vector<1x1x4x256xf32>
      %58 = vector.shape_cast %57 : vector<1x1x4x256xf32> to vector<4x256xf32>
      %59 = vector.shape_cast %56 : vector<4x256xf32> to vector<1x1x4x256xf32>
      tpu.vector_store %arg6[%c0_27, %c0_28, %c0_29, %c0_30], %59 {strides = array<i32>} : memref<1x1x4x256xf32, #tpu.memory_space<vmem>>, vector<1x1x4x256xf32>,
      %c0_31 = arith.constant 0 : index
      %c0_32 = arith.constant 0 : index
      %c0_33 = arith.constant 0 : index
      %c0_34 = arith.constant 0 : index
      %60 = vector.load %arg7[%c0_31, %c0_32, %c0_33, %c0_34] : memref<1x1x4x256xf32, #tpu.memory_space<vmem>>, vector<1x1x4x256xf32>
      %61 = vector.shape_cast %60 : vector<1x1x4x256xf32> to vector<4x256xf32>
      %62 = arith.maximumf %61, %41 : vector<4x256xf32>
      %c0_35 = arith.constant 0 : index
      %c0_36 = arith.constant 0 : index
      %c0_37 = arith.constant 0 : index
      %c0_38 = arith.constant 0 : index
      %63 = vector.load %arg7[%c0_35, %c0_36, %c0_37, %c0_38] : memref<1x1x4x256xf32, #tpu.memory_space<vmem>>, vector<1x1x4x256xf32>
      %64 = vector.shape_cast %63 : vector<1x1x4x256xf32> to vector<4x256xf32>
      %65 = vector.shape_cast %62 : vector<4x256xf32> to vector<1x1x4x256xf32>
      tpu.vector_store %arg7[%c0_35, %c0_36, %c0_37, %c0_38], %65 {strides = array<i32>} : memref<1x1x4x256xf32, #tpu.memory_space<vmem>>, vector<1x1x4x256xf32>,
    } else {
    }
    return
  }
  func.func @transform_0(%arg0: i32, %arg1: i32, %arg2: i32) -> (i32, i32, i32) {
    %c1_i32 = arith.constant 1 : i32
    %0 = arith.muli %arg1, %c1_i32 : i32
    %1 = arith.addi %0, %arg2 : i32
    %c0_i32 = arith.constant 0 : i32
    %c0_i32_0 = arith.constant 0 : i32
    return %arg0, %c0_i32, %1 : i32, i32, i32
  }
  func.func @transform_1(%arg0: i32, %arg1: i32, %arg2: i32) -> (i32, i32, i32) {
    %c1_i32 = arith.constant 1 : i32
    %0 = arith.muli %arg1, %c1_i32 : i32
    %1 = arith.addi %0, %arg2 : i32
    %c0_i32 = arith.constant 0 : i32
    %c0_i32_0 = arith.constant 0 : i32
    return %arg0, %c0_i32, %1 : i32, i32, i32
  }
  func.func @transform_2(%arg0: i32, %arg1: i32, %arg2: i32) -> (i32, i32, i32, i32) {
    %c0_i32 = arith.constant 0 : i32
    %c0_i32_0 = arith.constant 0 : i32
    %c0_i32_1 = arith.constant 0 : i32
    return %arg0, %arg1, %c0_i32, %c0_i32_0 : i32, i32, i32, i32
  }
  func.func @transform_3(%arg0: i32, %arg1: i32, %arg2: i32) -> (i32, i32, i32, i32) {
    %c0_i32 = arith.constant 0 : i32
    %c0_i32_0 = arith.constant 0 : i32
    %c0_i32_1 = arith.constant 0 : i32
    return %arg0, %arg1, %c0_i32, %c0_i32_0 : i32, i32, i32, i32
  }
  func.func @transform_4(%arg0: i32, %arg1: i32, %arg2: i32) -> (i32, i32, i32, i32) {
    %c0_i32 = arith.constant 0 : i32
    %c0_i32_0 = arith.constant 0 : i32
    %c0_i32_1 = arith.constant 0 : i32
    return %arg0, %arg1, %c0_i32, %c0_i32_0 : i32, i32, i32, i32
  }
}

</mosaic_0001>

<llo_original>
// kernel: jaccard_loss_multiclass.1
$region0: #{jaccard_loss_multiclass.1}
  #allocation0 [shape = 'u32[]', space=smem, size = 0x4, offset = 0x4, fixed_abs, tag = 'smem constant byte address 0x4 - core index']
  #allocation1 [shape = 'u32[144,128]{1,0:T(1,128)}', space=vmem, size = 0x12000, scoped, tag = 'internal scratch']
  %s0 = inlined_call_operand.vmem [shape: f32[2,4,256], index: 0, kind: input, shape index: {}]
  %s1 = inlined_call_operand.vmem [shape: s32[2,1,256], index: 1, kind: input, shape index: {}]
  %s2 = inlined_call_operand.vmem [shape: f32[2,1,4,256], index: 2, kind: output, shape index: {0}]
  %s3 = inlined_call_operand.vmem [shape: f32[2,1,4,256], index: 3, kind: output, shape index: {1}]
  %s4 = inlined_call_operand.vmem [shape: f32[2,1,4,256], index: 4, kind: output, shape index: {2}]
  %5 = xla_tuple %s2, %s3, %s4
  %s6 = sld [smem:[#allocation0]]
  $region65: #{jaccard_loss_multiclass.1} parent=0
    _
  %s8 = ssub.s32 1, %s6
  %s9 = scalar_select 0, %s8, %s6
  loop: start=0, step=1, limit=4
  $region2: #{jaccard_loss_multiclass.1} parent=0 // loop_pre_header
    _
  $region3: #{jaccard_loss_multiclass.1} parent=0 // loop_header
    %s11 = sphi 0, %s15
    %p12 = scmp.ge.s32.totalorder %s11, 4
    %s18 = sphi 0, %s37
    %s19 = sphi 0, %s33
    %s20 = sphi 0, %s29
    %s21 = sphi 0, %s18
    %s22 = sphi 0, %s19
    %s23 = sphi 0, %s20
    %s24 = sphi 0, %s21
    %s25 = sphi 0, %s22
    %s26 = sphi 0, %s23
    %s44 = sphi 0, %s46
    %s47 = sphi 0, %s44
    %s48 = sphi 0, %s47
    %s64 = sphi 0, %s48
    %s74 = sphi 0, %s76
    %s77 = sphi 0, %s74
    %s78 = sphi 0, %s77
    %s94 = sphi 0, %s78
    %s102 = sphi 0, %s104
    %s105 = sphi 0, %s102
    %s106 = sphi 0, %s105
    %s122 = sphi 0, %s106
    %s130 = sphi 0, %s132
    %s133 = sphi 0, %s130
    %s134 = sphi 0, %s133
    %s150 = sphi 0, %s134
    %s158 = sphi 0, %s160
    %s161 = sphi 0, %s158
    %s162 = sphi 0, %s161
    %s178 = sphi 0, %s162
  $region4: #{jaccard_loss_multiclass.1} parent=0 // loop_header_branch
    %14 = sbr.rel (%p12) target = $region8
  $region5: #{jaccard_loss_multiclass.1} parent=0 // loop_body
    %s16 = ssub.s32 %s11, 1
    %s17 = ssub.s32 %s11, 2
    %s27 = sadd.s32 1, %s20
    %p28 = scmp.ge.s32.totalorder %s27, 1
    %s29 = scalar_select %p28, 0, %s27
    %s30 = sadd.s32 1, %s19
    %s31 = scalar_select %p28, %s30, %s19
    %p32 = scmp.ge.s32.totalorder %s31, 1
    %s33 = scalar_select %p32, 0, %s31
    %s34 = sadd.s32 1, %s18
    %s35 = scalar_select %p32, %s34, %s18
    %p36 = scmp.ge.s32.totalorder %s35, 2
    %s37 = scalar_select %p36, 0, %s35
    %s38 = sadd.s32 %s19, %s20
    %s39 = sadd.s32 %s33, %s29
    %s40 = ssub.s32 %s18, %s37
    %s41 = ssub.s32 %s38, %s39
    %s42 = sor.u32 %s40, %s41
    %p43 = scmp.eq.s32.totalorder %s42, 0
    %s45 = sadd.s32 %s44, 1
    %s46 = scalar_select %p43, %s44, %s45
    %p49 = pneg %p43
    %p50 = scmp.eq.s32.totalorder %s11, 1
    %p51 = por %p49, %p50
    %p52 = scmp.ne.s32.totalorder %s44, %s47
    %p53 = scmp.eq.s32.totalorder %s11, 0
    %p54 = por %p52, %p53
    %p55 = scmp.ne.s32.totalorder %s44, %s47
    %p56 = scmp.eq.s32.totalorder %s16, 1
    %p57 = por %p55, %p56
    %p58 = scmp.ne.s32.totalorder %s47, %s48
    %p59 = scmp.eq.s32.totalorder %s16, 0
    %p60 = por %p58, %p59
    %p61 = scmp.ne.s32.totalorder %s47, %s48
    %p62 = scmp.eq.s32.totalorder %s17, 1
    %p63 = por %p61, %p62
    %p65 = scmp.ne.s32.totalorder %s48, %s64
    %p66 = scmp.eq.s32.totalorder %s17, 0
    %p67 = por %p65, %p66
    %s68 = sadd.s32 %s19, %s20
    %s69 = sadd.s32 %s33, %s29
    %s70 = ssub.s32 %s18, %s37
    %s71 = ssub.s32 %s68, %s69
    %s72 = sor.u32 %s70, %s71
    %p73 = scmp.eq.s32.totalorder %s72, 0
    %s75 = sadd.s32 %s74, 1
    %s76 = scalar_select %p73, %s74, %s75
    %p79 = pneg %p73
    %p80 = scmp.eq.s32.totalorder %s11, 1
    %p81 = por %p79, %p80
    %p82 = scmp.ne.s32.totalorder %s74, %s77
    %p83 = scmp.eq.s32.totalorder %s11, 0
    %p84 = por %p82, %p83
    %p85 = scmp.ne.s32.totalorder %s74, %s77
    %p86 = scmp.eq.s32.totalorder %s16, 1
    %p87 = por %p85, %p86
    %p88 = scmp.ne.s32.totalorder %s77, %s78
    %p89 = scmp.eq.s32.totalorder %s16, 0
    %p90 = por %p88, %p89
    %p91 = scmp.ne.s32.totalorder %s77, %s78
    %p92 = scmp.eq.s32.totalorder %s17, 1
    %p93 = por %p91, %p92
    %p95 = scmp.ne.s32.totalorder %s78, %s94
    %p96 = scmp.eq.s32.totalorder %s17, 0
    %p97 = por %p95, %p96
    %s98 = ssub.s32 %s18, %s37
    %s99 = ssub.s32 %s19, %s33
    %s100 = sor.u32 %s98, %s99
    %p101 = scmp.eq.s32.totalorder %s100, 0
    %s103 = sadd.s32 %s102, 1
    %s104 = scalar_select %p101, %s102, %s103
    %p107 = pneg %p101
    %p108 = scmp.eq.s32.totalorder %s11, 1
    %p109 = por %p107, %p108
    %p110 = scmp.ne.s32.totalorder %s102, %s105
    %p111 = scmp.eq.s32.totalorder %s11, 0
    %p112 = por %p110, %p111
    %p113 = scmp.ne.s32.totalorder %s102, %s105
    %p114 = scmp.eq.s32.totalorder %s16, 1
    %p115 = por %p113, %p114
    %p116 = scmp.ne.s32.totalorder %s105, %s106
    %p117 = scmp.eq.s32.totalorder %s16, 0
    %p118 = por %p116, %p117
    %p119 = scmp.ne.s32.totalorder %s105, %s106
    %p120 = scmp.eq.s32.totalorder %s17, 1
    %p121 = por %p119, %p120
    %p123 = scmp.ne.s32.totalorder %s106, %s122
    %p124 = scmp.eq.s32.totalorder %s17, 0
    %p125 = por %p123, %p124
    %s126 = ssub.s32 %s18, %s37
    %s127 = ssub.s32 %s19, %s33
    %s128 = sor.u32 %s126, %s127
    %p129 = scmp.eq.s32.totalorder %s128, 0
    %s131 = sadd.s32 %s130, 1
    %s132 = scalar_select %p129, %s130, %s131
    %p135 = pneg %p129
    %p136 = scmp.eq.s32.totalorder %s11, 1
    %p137 = por %p135, %p136
    %p138 = scmp.ne.s32.totalorder %s130, %s133
    %p139 = scmp.eq.s32.totalorder %s11, 0
    %p140 = por %p138, %p139
    %p141 = scmp.ne.s32.totalorder %s130, %s133
    %p142 = scmp.eq.s32.totalorder %s16, 1
    %p143 = por %p141, %p142
    %p144 = scmp.ne.s32.totalorder %s133, %s134
    %p145 = scmp.eq.s32.totalorder %s16, 0
    %p146 = por %p144, %p145
    %p147 = scmp.ne.s32.totalorder %s133, %s134
    %p148 = scmp.eq.s32.totalorder %s17, 1
    %p149 = por %p147, %p148
    %p151 = scmp.ne.s32.totalorder %s134, %s150
    %p152 = scmp.eq.s32.totalorder %s17, 0
    %p153 = por %p151, %p152
    %s154 = ssub.s32 %s18, %s37
    %s155 = ssub.s32 %s19, %s33
    %s156 = sor.u32 %s154, %s155
    %p157 = scmp.eq.s32.totalorder %s156, 0
    %s159 = sadd.s32 %s158, 1
    %s160 = scalar_select %p157, %s158, %s159
    %p163 = pneg %p157
    %p164 = scmp.eq.s32.totalorder %s11, 1
    %p165 = por %p163, %p164
    %p166 = scmp.ne.s32.totalorder %s158, %s161
    %p167 = scmp.eq.s32.totalorder %s11, 0
    %p168 = por %p166, %p167
    %p169 = scmp.ne.s32.totalorder %s158, %s161
    %p170 = scmp.eq.s32.totalorder %s16, 1
    %p171 = por %p169, %p170
    %p172 = scmp.ne.s32.totalorder %s161, %s162
    %p173 = scmp.eq.s32.totalorder %s16, 0
    %p174 = por %p172, %p173
    %p175 = scmp.ne.s32.totalorder %s161, %s162
    %p176 = scmp.eq.s32.totalorder %s17, 1
    %p177 = por %p175, %p176
    %p179 = scmp.ne.s32.totalorder %s162, %s178
    %p180 = scmp.eq.s32.totalorder %s17, 0
    %p181 = por %p179, %p180
    %p182 = scmp.le.s32.totalorder 1, %s11
    %p183 = scmp.lt.s32.totalorder %s11, 3
    %p184 = pnand %p182, %p183
    %p185 = pneg %p184
    // Predicated region
    $region9: #{jaccard_loss_multiclass.1} parent=5 // pred_check
      _
    $region10: #{jaccard_loss_multiclass.1} parent=5 // pred_check_branch
      %187 = sbr.rel (%p184) target = $region12
    $region11: #{jaccard_loss_multiclass.1} parent=5 // pred_region
      %s188 = ssub.s32 %s11, 1
    $region12: #{jaccard_loss_multiclass.1} parent=5 // pred_fallthru
      _
    %p189 = scmp.lt.s32.totalorder %s11, 2
    // Predicated region
    $region13: #{jaccard_loss_multiclass.1} parent=5 // pred_check
      %p190 = pneg %p189
    $region14: #{jaccard_loss_multiclass.1} parent=5 // pred_check_branch
      %192 = sbr.rel (%p190) target = $region16
    $region15: #{jaccard_loss_multiclass.1} parent=5 // pred_region
      // Predicated region
      $region17: #{jaccard_loss_multiclass.1} parent=15 // pred_check
        %p193 = pneg %p54
      $region18: #{jaccard_loss_multiclass.1} parent=15 // pred_check_branch
        %195 = sbr.rel (%p193) target = $region20
      $region19: #{jaccard_loss_multiclass.1} parent=15 // pred_region
        %s196 = sadd.s32 %s19, %s20
        %s197 = smul.u32 2, %s196
        %p198 = scmp.lt.s32.totalorder %s18, 1
        %s199 = scalar_select %p198, %s18, 1
        %p200 = scmp.lt.s32.totalorder %s197, 1
        %s201 = scalar_select %p200, %s197, 1
        %s202 = smul.addr %s199, 2
        %s203 = sadd.s32 %s201, %s202
        %s204 = smul.addr %s203, 4
        %s205 = scalar_lea.vmem %s0, %s204
        %s206 = sadd.s32 %s19, %s20
        %s207 = smul.u32 2, %s206
      $region20: #{jaccard_loss_multiclass.1} parent=15 // pred_fallthru
        _
      // Predicated region
      $region21: #{jaccard_loss_multiclass.1} parent=15 // pred_check
        %p208 = pneg %p84
      $region22: #{jaccard_loss_multiclass.1} parent=15 // pred_check_branch
        %210 = sbr.rel (%p208) target = $region24
      $region23: #{jaccard_loss_multiclass.1} parent=15 // pred_region
        %s211 = sadd.s32 %s19, %s20
        %s212 = smul.u32 2, %s211
        %p213 = scmp.lt.s32.totalorder %s18, 1
        %s214 = scalar_select %p213, %s18, 1
        %p215 = scmp.lt.s32.totalorder %s212, 1
        %s216 = scalar_select %p215, %s212, 1
        %s217 = smul.addr %s214, 2
        %s218 = sadd.s32 %s216, %s217
        %s219 = scalar_lea.vmem %s1, %s218
        %s220 = sadd.s32 %s19, %s20
        %s221 = smul.u32 2, %s220
      $region24: #{jaccard_loss_multiclass.1} parent=15 // pred_fallthru
        _
    $region16: #{jaccard_loss_multiclass.1} parent=5 // pred_fallthru
      _
    %p222 = scmp.le.s32.totalorder 1, %s11
    %p223 = scmp.lt.s32.totalorder %s11, 3
    %p224 = pnand %p222, %p223
    %p225 = pneg %p224
    // Predicated region
    $region25: #{jaccard_loss_multiclass.1} parent=5 // pred_check
      _
    $region26: #{jaccard_loss_multiclass.1} parent=5 // pred_check_branch
      %227 = sbr.rel (%p224) target = $region28
    $region27: #{jaccard_loss_multiclass.1} parent=5 // pred_region
      %s228 = ssub.s32 %s11, 1
      %s229 = sadd.s32 %s22, %s23
      %s230 = smul.u32 2, %s229
      %p231 = scmp.lt.s32.totalorder %s21, 1
      %s232 = scalar_select %p231, %s21, 1
      %p233 = scmp.lt.s32.totalorder %s230, 1
      %s234 = scalar_select %p233, %s230, 1
      %s235 = smul.addr %s232, 2
      %s236 = sadd.s32 %s234, %s235
      %s237 = smul.addr %s236, 4
      %s238 = scalar_lea.vmem %s0, %s237
      %p239 = pneg %p60
      %p240 = pneg %p57
      %s241 = sadd.s32 %s22, %s23
      %s242 = smul.u32 2, %s241
      %p243 = scmp.lt.s32.totalorder %s21, 1
      %s244 = scalar_select %p243, %s21, 1
      %p245 = scmp.lt.s32.totalorder %s242, 1
      %s246 = scalar_select %p245, %s242, 1
      %s247 = smul.addr %s244, 2
      %s248 = sadd.s32 %s246, %s247
      %s249 = scalar_lea.vmem %s1, %s248
      %p250 = pneg %p90
      %p251 = pneg %p87
      %p252 = pneg %p118
      %p253 = pneg %p115
      %p254 = scmp.lt.s32.totalorder %s21, 1
      %s255 = scalar_select %p254, %s21, 1
      %p256 = scmp.lt.s32.totalorder %s22, 0
      %s257 = scalar_select %p256, %s22, 0
      %s258 = smul.addr %s257, 2
      %s259 = smul.addr %s255, 2
      %s260 = sadd.s32 %s258, %s259
      %s261 = smul.addr %s260, 4
      %s262 = scalar_lea.vmem %s2, %s261
      %p263 = pneg %p146
      %p264 = pneg %p143
      %p265 = scmp.lt.s32.totalorder %s21, 1
      %s266 = scalar_select %p265, %s21, 1
      %p267 = scmp.lt.s32.totalorder %s22, 0
      %s268 = scalar_select %p267, %s22, 0
      %s269 = smul.addr %s268, 2
      %s270 = smul.addr %s266, 2
      %s271 = sadd.s32 %s269, %s270
      %s272 = smul.addr %s271, 4
      %s273 = scalar_lea.vmem %s3, %s272
      %p274 = pneg %p174
      %p275 = pneg %p171
      %p276 = scmp.lt.s32.totalorder %s21, 1
      %s277 = scalar_select %p276, %s21, 1
      %p278 = scmp.lt.s32.totalorder %s22, 0
      %s279 = scalar_select %p278, %s22, 0
      %s280 = smul.addr %s279, 2
      %s281 = smul.addr %s277, 2
      %s282 = sadd.s32 %s280, %s281
      %s283 = smul.addr %s282, 4
      %s284 = scalar_lea.vmem %s4, %s283
      %s285 = sadd.s32 %s22, %s23
      %s286 = smul.u32 2, %s285
      %p287 = scmp.lt.s32.totalorder %s21, 1
      %s288 = scalar_select %p287, %s21, 1
      %p289 = scmp.lt.s32.totalorder %s286, 1
      %s290 = scalar_select %p289, %s286, 1
      %s291 = smul.addr %s288, 2
      %s292 = sadd.s32 %s290, %s291
      %s293 = smul.addr %s292, 4
      %s294 = scalar_lea.vmem %s0, %s293
      %s295 = sadd.s32 %s22, %s23
      %s296 = smul.u32 2, %s295
      %s297 = sadd.s32 %s22, %s23
      %s298 = smul.u32 2, %s297
      %p299 = scmp.lt.s32.totalorder %s21, 1
      %s300 = scalar_select %p299, %s21, 1
      %p301 = scmp.lt.s32.totalorder %s298, 1
      %s302 = scalar_select %p301, %s298, 1
      %s303 = smul.addr %s300, 2
      %s304 = sadd.s32 %s302, %s303
      %s305 = scalar_lea.vmem %s1, %s304
      %s306 = sadd.s32 %s22, %s23
      %s307 = smul.u32 2, %s306
      %p308 = scmp.lt.s32.totalorder %s21, 1
      %s309 = scalar_select %p308, %s21, 1
      %p310 = scmp.lt.s32.totalorder %s22, 0
      %s311 = scalar_select %p310, %s22, 0
      %s312 = smul.addr %s311, 2
      %s313 = smul.addr %s309, 2
      %s314 = sadd.s32 %s312, %s313
      %s315 = smul.addr %s314, 4
      %s316 = scalar_lea.vmem %s2, %s315
      %p317 = scmp.lt.s32.totalorder %s21, 1
      %s318 = scalar_select %p317, %s21, 1
      %p319 = scmp.lt.s32.totalorder %s22, 0
      %s320 = scalar_select %p319, %s22, 0
      %s321 = smul.addr %s320, 2
      %s322 = smul.addr %s318, 2
      %s323 = sadd.s32 %s321, %s322
      %s324 = smul.addr %s323, 4
      %s325 = scalar_lea.vmem %s3, %s324
      %p326 = scmp.lt.s32.totalorder %s21, 1
      %s327 = scalar_select %p326, %s21, 1
      %p328 = scmp.lt.s32.totalorder %s22, 0
      %s329 = scalar_select %p328, %s22, 0
      %s330 = smul.addr %s329, 2
      %s331 = smul.addr %s327, 2
      %s332 = sadd.s32 %s330, %s331
      %s333 = smul.addr %s332, 4
      %s334 = scalar_lea.vmem %s4, %s333
      %s335 = sadd.s32 %s22, %s23
      %s336 = smul.u32 %s335, 256
      %s337 = ssub.s32 256, %s336
      %v338 = vlaneseq
      %v339 = vand.u32 %v338, 127
      %v340 = vadd.s32 %v339, 128
      %v341 = vlaneseq
      %v342 = vshrl.u32 %v341, 7
      %v343 = vld [vmem:[%s294] sm:$0xff]
      %v344 = vld [vmem:[%s305] sm:$0x3]
      %v346 = vcombine.high %v343, %v343
      %vm348 = vcmask 1043456
      %v349 = vsel %vm348, %v343, -inf
      %v350 = vrot.slane %v349, 4
      %v351 = vmax.f32 %v349, %v350
      %v352 = vrot.slane %v351, 2
      %v353 = vmax.f32 %v351, %v352
      %v354 = vrot.slane %v353, 1
      %v355 = vmax.f32 %v353, %v354
      %v356 = vsel %vm348, %v346, -inf
      %v357 = vrot.slane %v356, 4
      %v358 = vmax.f32 %v356, %v357
      %v359 = vrot.slane %v358, 2
      %v360 = vmax.f32 %v358, %v359
      %v361 = vrot.slane %v360, 1
      %v362 = vmax.f32 %v360, %v361
      %v365 = vcombine.low %v355, %v362
      %v367 = vsub.f32 %v343, %v365
      %v368 = vmul.f32 %v367, 1.442695
      %v369 = vpow.pop %v368
      %v371 = vcombine.high %v369, %v369
      %v373 = vsel %vm348, %v369, 0.0
      %v374 = vrot.slane %v373, 4
      %v375 = vadd.f32 %v373, %v374
      %v376 = vrot.slane %v375, 2
      %v377 = vadd.f32 %v375, %v376
      %v378 = vrot.slane %v377, 1
      %v379 = vadd.f32 %v377, %v378
      %v380 = vsel %vm348, %v371, 0.0
      %v381 = vrot.slane %v380, 4
      %v382 = vadd.f32 %v380, %v381
      %v383 = vrot.slane %v382, 2
      %v384 = vadd.f32 %v382, %v383
      %v385 = vrot.slane %v384, 1
      %v386 = vadd.f32 %v384, %v385
      %v387 = vrcp.pop %v379
      %v388 = vrcp.pop %v386
      %v391 = vcombine.low %v387, %v388
      %v393 = vmul.f32 %v369, %v391
      %v394 = vstv %s337
      %vm395 = vcmp.lt.s32.totalorder %v339, %v394
      %vm396 = vcmp.lt.s32.totalorder %v340, %v394
      %v397 = vsel %vm395, 1, 0
      %v398 = vsel %vm396, 1, 0
      %vm399 = vcmp.eq.s32.totalorder %v397, 1
      %vm400 = vcmp.eq.s32.totalorder %v398, 1
      %v402 = vcombine.high %v393, %v393
      %v404 = vsel %vm399, %v393, 0.0
      %v405 = vsel %vm400, %v402, 0.0
      %v406 = vlaneseq
      %v407 = vshrl.u32 %v406, 7
      %v408 = vsub.s32 0, %v407
      %v409 = vrot.slane %v344, %v408
      %v410 = vlaneseq
      %v411 = vshrl.u32 %v410, 7
      %v412 = vsub.s32 1, %v411
      %v413 = vrot.slane %v344, %v412
      %vm414 = vcmp.eq.s32.totalorder %v342, %v409
      %vm415 = vcmp.eq.s32.totalorder %v342, %v413
      %vm416 = vmand %vm414, %vm399
      %vm417 = vmand %vm415, %vm400
      %v418 = vsel %vm416, %v404, 0.0
      %v419 = vsel %vm417, %v405, 0.0
      %v420 = vadd.f32 %v418, 0.0
      %v421 = vadd.f32 %v419, 0.0
      %v422 = vsel %vm416, 1.0, %v404
      %v423 = vsel %vm417, 1.0, %v405
      %v424 = vadd.f32 %v422, 0.0
      %v425 = vadd.f32 %v423, 0.0
      %v426 = vsel %vm416, 1, 0
      %v427 = vsel %vm417, 1, 0
      %v428 = vcvt.s32.f32 %v426
      %v429 = vcvt.s32.f32 %v427
      %v430 = vmax.f32 %v428, 0.0
      %v431 = vmax.f32 %v429, 0.0
      %p432 = scmp.eq.s32.totalorder %s23, 0
      // Predicated region
      $region29: #{jaccard_loss_multiclass.1} parent=27 // pred_check
        %p433 = pneg %p432
      $region30: #{jaccard_loss_multiclass.1} parent=27 // pred_check_branch
        %435 = sbr.rel (%p433) target = $region32
      $region31: #{jaccard_loss_multiclass.1} parent=27 // pred_region
        %v438 = vcombine.low %v420, %v421
        %440 = vst [vmem:[%s316] sm:$0xff] %v438
        %v443 = vcombine.low %v424, %v425
        %445 = vst [vmem:[%s325] sm:$0xff] %v443
        %v448 = vcombine.low %v430, %v431
        %450 = vst [vmem:[%s334] sm:$0xff] %v448
      $region32: #{jaccard_loss_multiclass.1} parent=27 // pred_fallthru
        _
      %p451 = scmp.ne.s32.totalorder %s23, 0
      // Predicated region
      $region33: #{jaccard_loss_multiclass.1} parent=27 // pred_check
        %p452 = pneg %p451
      $region34: #{jaccard_loss_multiclass.1} parent=27 // pred_check_branch
        %454 = sbr.rel (%p452) target = $region36
      $region35: #{jaccard_loss_multiclass.1} parent=27 // pred_region
        %v455 = vld [vmem:[%s316] sm:$0xff]
        %v458 = vcombine.low %v420, %v421
        %v460 = vadd.f32 %v455, %v458
        %461 = vst [vmem:[%s316] sm:$0xff] %v460
        %v462 = vld [vmem:[%s325] sm:$0xff]
        %v465 = vcombine.low %v424, %v425
        %v467 = vadd.f32 %v462, %v465
        %468 = vst [vmem:[%s325] sm:$0xff] %v467
        %v469 = vld [vmem:[%s334] sm:$0xff]
        %v472 = vcombine.low %v430, %v431
        %v474 = vmax.f32 %v469, %v472
        %475 = vst [vmem:[%s334] sm:$0xff] %v474
      $region36: #{jaccard_loss_multiclass.1} parent=27 // pred_fallthru
        _
      %p476 = scmp.lt.s32.totalorder %s21, 1
      %s477 = scalar_select %p476, %s21, 1
      %p478 = scmp.lt.s32.totalorder %s22, 0
      %s479 = scalar_select %p478, %s22, 0
      %s480 = smul.addr %s479, 2
      %s481 = smul.addr %s477, 2
      %s482 = sadd.s32 %s480, %s481
      %s483 = smul.addr %s482, 4
      %s484 = scalar_lea.vmem %s2, %s483
      %p485 = scmp.lt.s32.totalorder %s21, 1
      %s486 = scalar_select %p485, %s21, 1
      %p487 = scmp.lt.s32.totalorder %s22, 0
      %s488 = scalar_select %p487, %s22, 0
      %s489 = smul.addr %s488, 2
      %s490 = smul.addr %s486, 2
      %s491 = sadd.s32 %s489, %s490
      %s492 = smul.addr %s491, 4
      %s493 = scalar_lea.vmem %s3, %s492
      %p494 = scmp.lt.s32.totalorder %s21, 1
      %s495 = scalar_select %p494, %s21, 1
      %p496 = scmp.lt.s32.totalorder %s22, 0
      %s497 = scalar_select %p496, %s22, 0
      %s498 = smul.addr %s497, 2
      %s499 = smul.addr %s495, 2
      %s500 = sadd.s32 %s498, %s499
      %s501 = smul.addr %s500, 4
      %s502 = scalar_lea.vmem %s4, %s501
      // Predicated region
      $region37: #{jaccard_loss_multiclass.1} parent=27 // pred_check
        %p503 = pneg %p115
      $region38: #{jaccard_loss_multiclass.1} parent=27 // pred_check_branch
        %505 = sbr.rel (%p503) target = $region40
      $region39: #{jaccard_loss_multiclass.1} parent=27 // pred_region
        _
      $region40: #{jaccard_loss_multiclass.1} parent=27 // pred_fallthru
        _
      // Predicated region
      $region41: #{jaccard_loss_multiclass.1} parent=27 // pred_check
        %p506 = pneg %p143
      $region42: #{jaccard_loss_multiclass.1} parent=27 // pred_check_branch
        %508 = sbr.rel (%p506) target = $region44
      $region43: #{jaccard_loss_multiclass.1} parent=27 // pred_region
        _
      $region44: #{jaccard_loss_multiclass.1} parent=27 // pred_fallthru
        _
      // Predicated region
      $region45: #{jaccard_loss_multiclass.1} parent=27 // pred_check
        %p509 = pneg %p171
      $region46: #{jaccard_loss_multiclass.1} parent=27 // pred_check_branch
        %511 = sbr.rel (%p509) target = $region48
      $region47: #{jaccard_loss_multiclass.1} parent=27 // pred_region
        _
      $region48: #{jaccard_loss_multiclass.1} parent=27 // pred_fallthru
        _
    $region28: #{jaccard_loss_multiclass.1} parent=5 // pred_fallthru
      _
    %p512 = scmp.le.s32.totalorder 2, %s11
    // Predicated region
    $region49: #{jaccard_loss_multiclass.1} parent=5 // pred_check
      %p513 = pneg %p512
    $region50: #{jaccard_loss_multiclass.1} parent=5 // pred_check_branch
      %515 = sbr.rel (%p513) target = $region52
    $region51: #{jaccard_loss_multiclass.1} parent=5 // pred_region
      %s516 = ssub.s32 %s11, 2
      // Predicated region
      $region53: #{jaccard_loss_multiclass.1} parent=51 // pred_check
        %p517 = pneg %p121
      $region54: #{jaccard_loss_multiclass.1} parent=51 // pred_check_branch
        %519 = sbr.rel (%p517) target = $region56
      $region55: #{jaccard_loss_multiclass.1} parent=51 // pred_region
        %p520 = scmp.lt.s32.totalorder %s24, 1
        %s521 = scalar_select %p520, %s24, 1
        %p522 = scmp.lt.s32.totalorder %s25, 0
        %s523 = scalar_select %p522, %s25, 0
        %s524 = smul.addr %s523, 2
        %s525 = smul.addr %s521, 2
        %s526 = sadd.s32 %s524, %s525
        %s527 = smul.addr %s526, 4
        %s528 = scalar_lea.vmem %s2, %s527
      $region56: #{jaccard_loss_multiclass.1} parent=51 // pred_fallthru
        _
      // Predicated region
      $region57: #{jaccard_loss_multiclass.1} parent=51 // pred_check
        %p529 = pneg %p149
      $region58: #{jaccard_loss_multiclass.1} parent=51 // pred_check_branch
        %531 = sbr.rel (%p529) target = $region60
      $region59: #{jaccard_loss_multiclass.1} parent=51 // pred_region
        %p532 = scmp.lt.s32.totalorder %s24, 1
        %s533 = scalar_select %p532, %s24, 1
        %p534 = scmp.lt.s32.totalorder %s25, 0
        %s535 = scalar_select %p534, %s25, 0
        %s536 = smul.addr %s535, 2
        %s537 = smul.addr %s533, 2
        %s538 = sadd.s32 %s536, %s537
        %s539 = smul.addr %s538, 4
        %s540 = scalar_lea.vmem %s3, %s539
      $region60: #{jaccard_loss_multiclass.1} parent=51 // pred_fallthru
        _
      // Predicated region
      $region61: #{jaccard_loss_multiclass.1} parent=51 // pred_check
        %p541 = pneg %p177
      $region62: #{jaccard_loss_multiclass.1} parent=51 // pred_check_branch
        %543 = sbr.rel (%p541) target = $region64
      $region63: #{jaccard_loss_multiclass.1} parent=51 // pred_region
        %p544 = scmp.lt.s32.totalorder %s24, 1
        %s545 = scalar_select %p544, %s24, 1
        %p546 = scmp.lt.s32.totalorder %s25, 0
        %s547 = scalar_select %p546, %s25, 0
        %s548 = smul.addr %s547, 2
        %s549 = smul.addr %s545, 2
        %s550 = sadd.s32 %s548, %s549
        %s551 = smul.addr %s550, 4
        %s552 = scalar_lea.vmem %s4, %s551
      $region64: #{jaccard_loss_multiclass.1} parent=51 // pred_fallthru
        _
    $region52: #{jaccard_loss_multiclass.1} parent=5 // pred_fallthru
      _
  $region6: #{jaccard_loss_multiclass.1} parent=0 // loop_footer
    %s15 = sadd.s32 1, %s11
  $region7: #{jaccard_loss_multiclass.1} parent=0 // loop_footer_branch
    %10 = sbr.rel target = $region3
  $region8: #{jaccard_loss_multiclass.1} parent=0 // loop_exit
    _

</llo_original>
